<compile_context>
chip_gen: v7x
topology: tpu7x:2x2x1
jax: 0.10.0
libtpu: 0.0.40
codegen_flags: <defaults>
</compile_context>

<pallas_src>
import functools

import jax
import jax.numpy as jnp
from jax.experimental import pallas as pl
from jax.experimental.pallas import tpu as pltpu

_LANE = 128
_SUBLANE = 8


def _round_up(n, m):
    return (n + m - 1) // m * m


def _mlp_kernel(x_ref, w1_ref, b1_ref, w2_ref, b2_ref, w3_ref, b3_ref, o_ref):
    # Layer 1: (TB, D_in) bf16 @ (D_in, 128) bf16 -> f32 acc, +bias, ReLU
    h1 = jnp.dot(x_ref[...], w1_ref[...], preferred_element_type=jnp.float32)
    h1 = jnp.maximum(h1 + b1_ref[...], 0.0)
    # Layer 2: (TB, 128) @ (128, 64) -> f32 acc, +bias, ReLU
    h2 = jnp.dot(h1.astype(w2_ref.dtype), w2_ref[...],
                 preferred_element_type=jnp.float32)
    h2 = jnp.maximum(h2 + b2_ref[...], 0.0)
    # Layer 3: (TB, 64) @ (64, D_out_pad) -> f32 acc, +bias (lane-dense output)
    h3 = jnp.dot(h2.astype(w3_ref.dtype), w3_ref[...],
                 preferred_element_type=jnp.float32)
    o_ref[...] = (h3 + b3_ref[...]).astype(o_ref.dtype)


def mlp_forward(x, params, *, max_batch_tile=512):
    """Fused 3-layer MLP forward.

    x: (B, D_in) float32
    params: dict with w1 (D_in,128), b1 (1,128), w2 (128,64), b2 (1,64),
            w3 (64,D_out), b3 (1,D_out)   (weights stored as PyTorch W^T)
    """
    B, D_in = x.shape
    D_out = params["w3"].shape[1]
    D_out_pad = _round_up(D_out, _LANE)

    # bf16 inputs/weights, f32 biases/accumulation. Pad layer-3 output dim to a
    # multiple of 128 so the writeback is lane-dense (unmasked vst).
    w1 = params["w1"].astype(jnp.bfloat16)
    w2 = params["w2"].astype(jnp.bfloat16)
    w3 = jnp.pad(params["w3"],
                 ((0, 0), (0, D_out_pad - D_out))).astype(jnp.bfloat16)
    b1 = params["b1"].astype(jnp.float32)
    b2 = params["b2"].astype(jnp.float32)
    b3 = jnp.pad(params["b3"], ((0, 0), (0, D_out_pad - D_out))).astype(jnp.float32)

    # Pick a batch tile: as large as possible but keep double-buffered x/out
    # tiles well under scoped VMEM on every chip (incl. v7x's 64 MiB part).
    vmem_tile_budget = 16 * 1024 * 1024
    tb = min(max_batch_tile, _round_up(B, _SUBLANE))
    while tb > _SUBLANE and 2 * (tb * D_in * 2 + tb * D_out_pad * 4) > vmem_tile_budget:
        tb //= 2
    tb = max(_SUBLANE, _round_up(tb, _SUBLANE))

    B_pad = _round_up(B, tb)
    xb = x.astype(jnp.bfloat16)
    if B_pad != B:
        xb = jnp.pad(xb, ((0, B_pad - B), (0, 0)))

    grid = (B_pad // tb,)

    # Weights/biases: constant index_map -> fetched once, VMEM-resident.
    const = lambda a: pl.BlockSpec(a.shape, lambda i: (0,) * a.ndim)

    flops = 2 * B_pad * (D_in * 128 + 128 * 64 + 64 * D_out_pad)
    bytes_accessed = (
        xb.size * 2                                   # x (bf16)
        + (w1.size + w2.size + w3.size) * 2           # weights (bf16)
        + (b1.size + b2.size + b3.size) * 4           # biases (f32)
        + B_pad * D_out_pad * 4                       # output (f32)
    )

    out = pl.pallas_call(
        _mlp_kernel,
        out_shape=jax.ShapeDtypeStruct((B_pad, D_out_pad), jnp.float32),
        grid=grid,
        in_specs=[
            pl.BlockSpec((tb, D_in), lambda i: (i, 0)),
            const(w1), const(b1), const(w2), const(b2), const(w3), const(b3),
        ],
        out_specs=pl.BlockSpec((tb, D_out_pad), lambda i: (i, 0)),
        compiler_params=pltpu.CompilerParams(
            dimension_semantics=("parallel",),
            vmem_limit_bytes=32 * 1024 * 1024,
        ),
        cost_estimate=pl.CostEstimate(
            flops=flops, transcendentals=0, bytes_accessed=bytes_accessed),
    )(xb, w1, b1, w2, b2, w3, b3)

    return out[:B, :D_out]


def init_mlp_params(key, input_dim, output_dim):
    """Deterministic init mimicking nn.Linear (uniform +/- 1/sqrt(fan_in)).

    Weights are stored transposed relative to PyTorch: (in_features, out_features).
    """
    dims = [(input_dim, 128), (128, 64), (64, output_dim)]
    params = {}
    for i, (fan_in, fan_out) in enumerate(dims, start=1):
        key, kw, kb = jax.random.split(key, 3)
        bound = 1.0 / jnp.sqrt(float(fan_in))
        params[f"w{i}"] = jax.random.uniform(
            kw, (fan_in, fan_out), jnp.float32, -bound, bound)
        params[f"b{i}"] = jax.random.uniform(
            kb, (1, fan_out), jnp.float32, -bound, bound)
    return params


@functools.partial(jax.jit, static_argnames=("use_teacher",))
def mean_teacher_forward(x, student_params, teacher_params, use_teacher=False):
    # Mirrors MeanTeacherModel.forward: select the teacher or student branch.
    # use_teacher is a static Python bool (as in the PyTorch module); if it ever
    # becomes a traced value, switch to lax.cond over stacked params.
    return mlp_forward(x, teacher_params if use_teacher else student_params)


if __name__ == "__main__":
    input_dim, output_dim = 32, 8
    batch = 8

    key = jax.random.PRNGKey(0)
    k_x, k_student, k_teacher = jax.random.split(key, 3)

    x = jax.random.normal(k_x, (batch, input_dim), jnp.float32)

    student_params = init_mlp_params(k_student, input_dim, output_dim)
    # _update_teacher_weights(alpha=1.0) keeps the teacher's own independent init.
    teacher_params = init_mlp_params(k_teacher, input_dim, output_dim)

    out_student = mean_teacher_forward(x, student_params, teacher_params,
                                       use_teacher=False)
    out_teacher = mean_teacher_forward(x, student_params, teacher_params,
                                       use_teacher=True)
    jax.block_until_ready(out_student)
    jax.block_until_ready(out_teacher)

    # Also exercise the batch-padding path (B not a multiple of the tile).
    x_odd = jax.random.normal(k_x, (10, input_dim), jnp.float32)
    out_odd = mlp_forward(x_odd, student_params)
    jax.block_until_ready(out_odd)

    # References: bf16-matched (tight) and pure f32 (loose, bf16 rounding only).
    def ref_bf16(x, p):
        h = jnp.dot(x.astype(jnp.bfloat16), p["w1"].astype(jnp.bfloat16),
                    preferred_element_type=jnp.float32) + p["b1"]
        h = jnp.maximum(h, 0.0)
        h = jnp.dot(h.astype(jnp.bfloat16), p["w2"].astype(jnp.bfloat16),
                    preferred_element_type=jnp.float32) + p["b2"]
        h = jnp.maximum(h, 0.0)
        return jnp.dot(h.astype(jnp.bfloat16), p["w3"].astype(jnp.bfloat16),
                       preferred_element_type=jnp.float32) + p["b3"]

    def ref_f32(x, p):
        h = jnp.maximum(x @ p["w1"] + p["b1"], 0.0)
        h = jnp.maximum(h @ p["w2"] + p["b2"], 0.0)
        return h @ p["w3"] + p["b3"]

    assert out_student.shape == (batch, output_dim)
    assert out_teacher.shape == (batch, output_dim)
    assert out_odd.shape == (10, output_dim)
    assert jnp.allclose(out_student, ref_bf16(x, student_params), atol=5e-3)
    assert jnp.allclose(out_teacher, ref_bf16(x, teacher_params), atol=5e-3)
    assert jnp.allclose(out_odd, ref_bf16(x_odd, student_params), atol=5e-3)
    assert jnp.allclose(out_student, ref_f32(x, student_params), atol=5e-2, rtol=5e-2)
    assert jnp.allclose(out_teacher, ref_f32(x, teacher_params), atol=5e-2, rtol=5e-2)

    print("KERNEL_OK")
</pallas_src>

<mosaic_0001>
module attributes {stable_mosaic.version = 11 : i64} {
  func.func @_mlp_kernel(%arg0: i32, %arg1: memref<8x32xbf16, #tpu.memory_space<vmem>>, %arg2: memref<32x128xbf16, #tpu.memory_space<vmem>>, %arg3: memref<1x128xf32, #tpu.memory_space<vmem>>, %arg4: memref<128x64xbf16, #tpu.memory_space<vmem>>, %arg5: memref<1x64xf32, #tpu.memory_space<vmem>>, %arg6: memref<64x128xbf16, #tpu.memory_space<vmem>>, %arg7: memref<1x128xf32, #tpu.memory_space<vmem>>, %arg8: memref<8x128xf32, #tpu.memory_space<vmem>>) attributes {dimension_semantics = [#tpu.dimension_semantics<parallel>], iteration_bounds = array<i64: 1>, scalar_prefetch = 0 : i64, scratch_operands = 0 : i64, tpu.core_type = #tpu.core_type<tc>, window_params = [{transform_indices = @transform_0, window_bounds = array<i64: 8, 32>}, {pipeline_mode = #tpu.pipeline_mode<synchronous>, transform_indices = @transform_1, window_bounds = array<i64: 32, 128>}, {pipeline_mode = #tpu.pipeline_mode<synchronous>, transform_indices = @transform_2, window_bounds = array<i64: 1, 128>}, {pipeline_mode = #tpu.pipeline_mode<synchronous>, transform_indices = @transform_3, window_bounds = array<i64: 128, 64>}, {pipeline_mode = #tpu.pipeline_mode<synchronous>, transform_indices = @transform_4, window_bounds = array<i64: 1, 64>}, {pipeline_mode = #tpu.pipeline_mode<synchronous>, transform_indices = @transform_5, window_bounds = array<i64: 64, 128>}, {pipeline_mode = #tpu.pipeline_mode<synchronous>, transform_indices = @transform_6, window_bounds = array<i64: 1, 128>}, {transform_indices = @transform_7, window_bounds = array<i64: 8, 128>}]} {
    %c0 = arith.constant 0 : index
    %c0_0 = arith.constant 0 : index
    %0 = vector.load %arg1[%c0, %c0_0] : memref<8x32xbf16, #tpu.memory_space<vmem>>, vector<8x32xbf16>
    %c0_1 = arith.constant 0 : index
    %c0_2 = arith.constant 0 : index
    %1 = vector.load %arg2[%c0_1, %c0_2] : memref<32x128xbf16, #tpu.memory_space<vmem>>, vector<32x128xbf16>
    %cst = arith.constant dense<0.000000e+00> : vector<8x128xf32>
    %2 = tpu.matmul %0, %1, %cst {dimension_numbers = #tpu.dot_dimension_numbers<[1], [0], [0], [1], [0, 0, 1, 1], [], []>} : vector<8x32xbf16>, vector<32x128xbf16>, vector<8x128xf32> -> vector<8x128xf32>
    %c0_3 = arith.constant 0 : index
    %c0_4 = arith.constant 0 : index
    %3 = vector.load %arg3[%c0_3, %c0_4] : memref<1x128xf32, #tpu.memory_space<vmem>>, vector<1x128xf32>
    %4 = vector.broadcast %3 : vector<1x128xf32> to vector<8x128xf32>
    %5 = arith.addf %2, %4 : vector<8x128xf32>
    %cst_5 = arith.constant 0.000000e+00 : f32
    %6 = vector.broadcast %cst_5 : f32 to vector<8x128xf32>
    %7 = arith.maximumf %5, %6 : vector<8x128xf32>
    %8 = arith.truncf %7 : vector<8x128xf32> to vector<8x128xbf16>
    %c0_6 = arith.constant 0 : index
    %c0_7 = arith.constant 0 : index
    %9 = vector.load %arg4[%c0_6, %c0_7] : memref<128x64xbf16, #tpu.memory_space<vmem>>, vector<128x64xbf16>
    %cst_8 = arith.constant dense<0.000000e+00> : vector<8x64xf32>
    %10 = tpu.matmul %8, %9, %cst_8 {dimension_numbers = #tpu.dot_dimension_numbers<[1], [0], [0], [1], [0, 0, 1, 1], [], []>} : vector<8x128xbf16>, vector<128x64xbf16>, vector<8x64xf32> -> vector<8x64xf32>
    %c0_9 = arith.constant 0 : index
    %c0_10 = arith.constant 0 : index
    %11 = vector.load %arg5[%c0_9, %c0_10] : memref<1x64xf32, #tpu.memory_space<vmem>>, vector<1x64xf32>
    %12 = vector.broadcast %11 : vector<1x64xf32> to vector<8x64xf32>
    %13 = arith.addf %10, %12 : vector<8x64xf32>
    %cst_11 = arith.constant 0.000000e+00 : f32
    %14 = vector.broadcast %cst_11 : f32 to vector<8x64xf32>
    %15 = arith.maximumf %13, %14 : vector<8x64xf32>
    %16 = arith.truncf %15 : vector<8x64xf32> to vector<8x64xbf16>
    %c0_12 = arith.constant 0 : index
    %c0_13 = arith.constant 0 : index
    %17 = vector.load %arg6[%c0_12, %c0_13] : memref<64x128xbf16, #tpu.memory_space<vmem>>, vector<64x128xbf16>
    %cst_14 = arith.constant dense<0.000000e+00> : vector<8x128xf32>
    %18 = tpu.matmul %16, %17, %cst_14 {dimension_numbers = #tpu.dot_dimension_numbers<[1], [0], [0], [1], [0, 0, 1, 1], [], []>} : vector<8x64xbf16>, vector<64x128xbf16>, vector<8x128xf32> -> vector<8x128xf32>
    %c0_15 = arith.constant 0 : index
    %c0_16 = arith.constant 0 : index
    %19 = vector.load %arg7[%c0_15, %c0_16] : memref<1x128xf32, #tpu.memory_space<vmem>>, vector<1x128xf32>
    %20 = vector.broadcast %19 : vector<1x128xf32> to vector<8x128xf32>
    %21 = arith.addf %18, %20 : vector<8x128xf32>
    %c0_17 = arith.constant 0 : index
    %c0_18 = arith.constant 0 : index
    %22 = vector.load %arg8[%c0_17, %c0_18] : memref<8x128xf32, #tpu.memory_space<vmem>>, vector<8x128xf32>
    tpu.vector_store %arg8[%c0_17, %c0_18], %21 {strides = array<i32>} : memref<8x128xf32, #tpu.memory_space<vmem>>, vector<8x128xf32>,
    return
  }
  func.func @transform_0(%arg0: i32) -> (i32, i32) {
    %c0_i32 = arith.constant 0 : i32
    %c0_i32_0 = arith.constant 0 : i32
    return %arg0, %c0_i32 : i32, i32
  }
  func.func @transform_1(%arg0: i32) -> (i32, i32) {
    %c0_i32 = arith.constant 0 : i32
    %c0_i32_0 = arith.constant 0 : i32
    %c0_i32_1 = arith.constant 0 : i32
    return %c0_i32, %c0_i32_0 : i32, i32
  }
  func.func @transform_2(%arg0: i32) -> (i32, i32) {
    %c0_i32 = arith.constant 0 : i32
    %c0_i32_0 = arith.constant 0 : i32
    %c0_i32_1 = arith.constant 0 : i32
    return %c0_i32, %c0_i32_0 : i32, i32
  }
  func.func @transform_3(%arg0: i32) -> (i32, i32) {
    %c0_i32 = arith.constant 0 : i32
    %c0_i32_0 = arith.constant 0 : i32
    %c0_i32_1 = arith.constant 0 : i32
    return %c0_i32, %c0_i32_0 : i32, i32
  }
  func.func @transform_4(%arg0: i32) -> (i32, i32) {
    %c0_i32 = arith.constant 0 : i32
    %c0_i32_0 = arith.constant 0 : i32
    %c0_i32_1 = arith.constant 0 : i32
    return %c0_i32, %c0_i32_0 : i32, i32
  }
  func.func @transform_5(%arg0: i32) -> (i32, i32) {
    %c0_i32 = arith.constant 0 : i32
    %c0_i32_0 = arith.constant 0 : i32
    %c0_i32_1 = arith.constant 0 : i32
    return %c0_i32, %c0_i32_0 : i32, i32
  }
  func.func @transform_6(%arg0: i32) -> (i32, i32) {
    %c0_i32 = arith.constant 0 : i32
    %c0_i32_0 = arith.constant 0 : i32
    %c0_i32_1 = arith.constant 0 : i32
    return %c0_i32, %c0_i32_0 : i32, i32
  }
  func.func @transform_7(%arg0: i32) -> (i32, i32) {
    %c0_i32 = arith.constant 0 : i32
    %c0_i32_0 = arith.constant 0 : i32
    return %arg0, %c0_i32 : i32, i32
  }
}

</mosaic_0001>

<llo_original>
// kernel: mean_teacher_forward.1
$region0: #{mean_teacher_forward.1}
  #allocation0 [shape = 'u32[]', space=smem, size = 0x4, offset = 0x4, fixed_abs, tag = 'smem constant byte address 0x4 - core index']
  #allocation1 [shape = 'u32[144,128]{1,0:T(1,128)}', space=vmem, size = 0x12000, scoped, tag = 'internal scratch']
  %s0 = inlined_call_operand.vmem [shape: bf16[8,32], index: 0, kind: input, shape index: {}]
  %s1 = inlined_call_operand.vmem [shape: bf16[32,128], index: 1, kind: input, shape index: {}]
  %s2 = inlined_call_operand.vmem [shape: f32[1,128], index: 2, kind: input, shape index: {}]
  %s3 = inlined_call_operand.vmem [shape: bf16[128,64], index: 3, kind: input, shape index: {}]
  %s4 = inlined_call_operand.vmem [shape: f32[1,64], index: 4, kind: input, shape index: {}]
  %s5 = inlined_call_operand.vmem [shape: bf16[64,128], index: 5, kind: input, shape index: {}]
  %s6 = inlined_call_operand.vmem [shape: f32[1,128], index: 6, kind: input, shape index: {}]
  %s7 = inlined_call_operand.hbm [shape: f32[8,128], index: 7, kind: output, shape index: {}]
  %s8 = sld [smem:[#allocation0]]
  $region38: #{mean_teacher_forward.1} parent=0
    _
  %s10 = ssub.s32 1, %s8
  %s11 = scalar_select 0, %s10, %s8
  $region1: #{mean_teacher_forward.1} parent=0
    #allocation2 [shape = 'u8[4096]{0}', space=vmem, size = 0x1000, scoped, tag = 'output window, operand 0, single buffered']
    #allocation3 [shape = 's32[1]{0}', space=sflag, size = 0x4, scoped, tag = 'scoped memory for mean_teacher_forward.1']
    %12 = vsyncpa [#allocation3], 0
    // Predicated region
    $region2: #{mean_teacher_forward.1} parent=1 // pred_check
      _
    $region3: #{mean_teacher_forward.1} parent=1 // pred_check_branch
      %14 = sbr.rel (0) target = $region5
    $region4: #{mean_teacher_forward.1} parent=1 // pred_region
      _
    $region5: #{mean_teacher_forward.1} parent=1 // pred_fallthru
      _
    // Predicated region
    $region6: #{mean_teacher_forward.1} parent=1 // pred_check
      _
    $region7: #{mean_teacher_forward.1} parent=1 // pred_check_branch
      %16 = sbr.rel (0) target = $region9
    $region8: #{mean_teacher_forward.1} parent=1 // pred_region
      _
    $region9: #{mean_teacher_forward.1} parent=1 // pred_fallthru
      _
    // Predicated region
    $region10: #{mean_teacher_forward.1} parent=1 // pred_check
      _
    $region11: #{mean_teacher_forward.1} parent=1 // pred_check_branch
      %18 = sbr.rel (0) target = $region13
    $region12: #{mean_teacher_forward.1} parent=1 // pred_region
      _
    $region13: #{mean_teacher_forward.1} parent=1 // pred_fallthru
      _
    // Predicated region
    $region14: #{mean_teacher_forward.1} parent=1 // pred_check
      _
    $region15: #{mean_teacher_forward.1} parent=1 // pred_check_branch
      %20 = sbr.rel (0) target = $region17
    $region16: #{mean_teacher_forward.1} parent=1 // pred_region
      _
    $region17: #{mean_teacher_forward.1} parent=1 // pred_fallthru
      _
    // Predicated region
    $region18: #{mean_teacher_forward.1} parent=1 // pred_check
      _
    $region19: #{mean_teacher_forward.1} parent=1 // pred_check_branch
      %22 = sbr.rel (0) target = $region21
    $region20: #{mean_teacher_forward.1} parent=1 // pred_region
      _
    $region21: #{mean_teacher_forward.1} parent=1 // pred_fallthru
      _
    // Predicated region
    $region22: #{mean_teacher_forward.1} parent=1 // pred_check
      _
    $region23: #{mean_teacher_forward.1} parent=1 // pred_check_branch
      %24 = sbr.rel (0) target = $region25
    $region24: #{mean_teacher_forward.1} parent=1 // pred_region
      _
    $region25: #{mean_teacher_forward.1} parent=1 // pred_fallthru
      _
    // Predicated region
    $region26: #{mean_teacher_forward.1} parent=1 // pred_check
      _
    $region27: #{mean_teacher_forward.1} parent=1 // pred_check_branch
      %26 = sbr.rel (0) target = $region29
    $region28: #{mean_teacher_forward.1} parent=1 // pred_region
      _
    $region29: #{mean_teacher_forward.1} parent=1 // pred_fallthru
      _
    %v28 = vld [vmem:[%s0] sm:$0xf]
    %v29 = vld [vmem:[%s1] sm:$0xf]
    %v30 = vld [vmem:[%s1 + $0x4] sm:$0xf]
    %v31 = vld [vmem:[%s1 + $0x8] sm:$0xf]
    %v32 = vld [vmem:[%s1 + $0xc] sm:$0xf]
    %v33 = vld [vmem:[%s2] sm:$0x1]
    %v35 = vlaneseq
    %v36 = vshrl.u32 %v35, 7
    %v37 = vsub.s32 0, %v36
    %v38 = vrot.slane %v33, %v37
    %v44 = vunpack.c.l.b16 %v29
    %v45 = vunpack.c.l.b16 %v30
    %v46 = vunpack.c.l.b16 %v31
    %v47 = vunpack.c.l.b16 %v32
    %v48 = vpack.c.b16 %v45, %v44
    %v49 = vpack.c.b16 %v47, %v46
    %vm52 = vcmask 261120
    %v54 = vsel %vm52, %v28, 0
    %56 = vmatprep.subr.bf16.mxu0 0
    %57 = vmatpush1.bf16.msra.mxu0 %v48
    %58 = vmatprep.subr.bf16.mxu0 0
    %59 = vmatpush1.bf16.msra.mxu0 %v49
    %60 = vmatprep.subr.bf16.mxu0 0
    %61 = vmatpush1.bf16.msra.mxu0 0
    %62 = vmatprep.subr.bf16.mxu0 0
    %63 = vmatpush1.bf16.msra.mxu0 0
    %64 = vmatprep.subr.bf16.mxu0 0
    %65 = vmatpush1.bf16.msra.mxu0 0
    %66 = vmatprep.subr.bf16.mxu0 0
    %67 = vmatpush1.bf16.msra.mxu0 0
    %68 = vmatprep.subr.bf16.mxu0 0
    %69 = vmatpush1.bf16.msra.mxu0 0
    %70 = vmatprep.subr.bf16.mxu0 0
    %71 = vmatpush1.bf16.msra.mxu0 0
    %72 = vmatprep.subr.bf16.mxu0 0
    %73 = vmatpush1.bf16.msra.mxu0 0
    %74 = vmatprep.subr.bf16.mxu0 0
    %75 = vmatpush1.bf16.msra.mxu0 0
    %76 = vmatprep.subr.bf16.mxu0 0
    %77 = vmatpush1.bf16.msra.mxu0 0
    %78 = vmatprep.subr.bf16.mxu0 0
    %79 = vmatpush1.bf16.msra.mxu0 0
    %80 = vmatprep.subr.bf16.mxu0 0
    %81 = vmatpush1.bf16.msra.mxu0 0
    %82 = vmatprep.subr.bf16.mxu0 0
    %83 = vmatpush1.bf16.msra.mxu0 0
    %84 = vmatprep.subr.bf16.mxu0 0
    %85 = vmatpush1.bf16.msra.mxu0 0
    %86 = vmatprep.subr.bf16.mxu0 0
    %87 = vmatpush1.bf16.msra.mxu0 0
    %88 = vmatprep.mubr.bf16.mxu0 0
    %89 = vmatmul.mubr.bf16.gmra.mrb[0].mxu0 %v54
    %v90 = vpop.f32.mrb[0].mxu0
    %v91 = vadd.f32 %v38, %v90
    %v92 = vpop.f32.mrb[0].mxu0
    %v93 = vpop.f32.mrb[0].mxu0
    %v94 = vpop.f32.mrb[0].mxu0
    %95 = vdwg.mxu0
    %v96 = vmax.f32 %v91, 0.0
    %v97 = vpack.c.bf16 %v96, %v96
    %v98 = vld [vmem:[%s3] sm:$0xf]
    %v99 = vld [vmem:[%s3 + $0x4] sm:$0xf]
    %v100 = vld [vmem:[%s3 + $0x8] sm:$0xf]
    %v101 = vld [vmem:[%s3 + $0xc] sm:$0xf]
    %v102 = vld [vmem:[%s3 + $0x10] sm:$0xf]
    %v103 = vld [vmem:[%s3 + $0x14] sm:$0xf]
    %v104 = vld [vmem:[%s3 + $0x18] sm:$0xf]
    %v105 = vld [vmem:[%s3 + $0x1c] sm:$0xf]
    %v106 = vld [vmem:[%s3 + $0x20] sm:$0xf]
    %v107 = vld [vmem:[%s3 + $0x24] sm:$0xf]
    %v108 = vld [vmem:[%s3 + $0x28] sm:$0xf]
    %v109 = vld [vmem:[%s3 + $0x2c] sm:$0xf]
    %v110 = vld [vmem:[%s3 + $0x30] sm:$0xf]
    %v111 = vld [vmem:[%s3 + $0x34] sm:$0xf]
    %v112 = vld [vmem:[%s3 + $0x38] sm:$0xf]
    %v113 = vld [vmem:[%s3 + $0x3c] sm:$0xf]
    %v114 = vld [vmem:[%s4] sm:$0x1]
    %v116 = vlaneseq
    %v117 = vshrl.u32 %v116, 7
    %v118 = vsub.s32 0, %v117
    %v119 = vrot.slane %v114, %v118
    %v137 = vunpack.c.l.b16 %v98
    %v138 = vunpack.c.l.b16 %v99
    %v139 = vunpack.c.l.b16 %v100
    %v140 = vunpack.c.l.b16 %v101
    %v141 = vunpack.c.l.b16 %v102
    %v142 = vunpack.c.l.b16 %v103
    %v143 = vunpack.c.l.b16 %v104
    %v144 = vunpack.c.l.b16 %v105
    %v145 = vunpack.c.l.b16 %v106
    %v146 = vunpack.c.l.b16 %v107
    %v147 = vunpack.c.l.b16 %v108
    %v148 = vunpack.c.l.b16 %v109
    %v149 = vunpack.c.l.b16 %v110
    %v150 = vunpack.c.l.b16 %v111
    %v151 = vunpack.c.l.b16 %v112
    %v152 = vunpack.c.l.b16 %v113
    %v153 = vpack.c.b16 %v138, %v137
    %v154 = vpack.c.b16 %v140, %v139
    %v155 = vpack.c.b16 %v142, %v141
    %v156 = vpack.c.b16 %v144, %v143
    %v157 = vpack.c.b16 %v146, %v145
    %v158 = vpack.c.b16 %v148, %v147
    %v159 = vpack.c.b16 %v150, %v149
    %v160 = vpack.c.b16 %v152, %v151
    %169 = vmatprep.subr.bf16.mxu0 0
    %170 = vmatpush1.bf16.msra.mxu0 %v153
    %171 = vmatprep.subr.bf16.mxu0 0
    %172 = vmatpush1.bf16.msra.mxu0 %v154
    %173 = vmatprep.subr.bf16.mxu0 0
    %174 = vmatpush1.bf16.msra.mxu0 %v155
    %175 = vmatprep.subr.bf16.mxu0 0
    %176 = vmatpush1.bf16.msra.mxu0 %v156
    %177 = vmatprep.subr.bf16.mxu0 0
    %178 = vmatpush1.bf16.msra.mxu0 %v157
    %179 = vmatprep.subr.bf16.mxu0 0
    %180 = vmatpush1.bf16.msra.mxu0 %v158
    %181 = vmatprep.subr.bf16.mxu0 0
    %182 = vmatpush1.bf16.msra.mxu0 %v159
    %183 = vmatprep.subr.bf16.mxu0 0
    %184 = vmatpush1.bf16.msra.mxu0 %v160
    %185 = vmatprep.subr.bf16.mxu0 0
    %186 = vmatpush1.bf16.msra.mxu0 0
    %187 = vmatprep.subr.bf16.mxu0 0
    %188 = vmatpush1.bf16.msra.mxu0 0
    %189 = vmatprep.subr.bf16.mxu0 0
    %190 = vmatpush1.bf16.msra.mxu0 0
    %191 = vmatprep.subr.bf16.mxu0 0
    %192 = vmatpush1.bf16.msra.mxu0 0
    %193 = vmatprep.subr.bf16.mxu0 0
    %194 = vmatpush1.bf16.msra.mxu0 0
    %195 = vmatprep.subr.bf16.mxu0 0
    %196 = vmatpush1.bf16.msra.mxu0 0
    %197 = vmatprep.subr.bf16.mxu0 0
    %198 = vmatpush1.bf16.msra.mxu0 0
    %199 = vmatprep.subr.bf16.mxu0 0
    %200 = vmatpush1.bf16.msra.mxu0 0
    %201 = vmatprep.mubr.bf16.mxu0 0
    %202 = vmatmul.mubr.bf16.gmra.mrb[0].mxu0 %v97
    %v203 = vpop.f32.mrb[0].mxu0
    %v204 = vadd.f32 %v119, %v203
    %v205 = vpop.f32.mrb[0].mxu0
    %v206 = vpop.f32.mrb[0].mxu0
    %v207 = vpop.f32.mrb[0].mxu0
    %208 = vdwg.mxu0
    %v209 = vmax.f32 %v204, 0.0
    %v210 = vpack.c.bf16 %v209, %v209
    %v211 = vld [vmem:[%s5] sm:$0xf]
    %v212 = vld [vmem:[%s5 + $0x4] sm:$0xf]
    %v213 = vld [vmem:[%s5 + $0x8] sm:$0xf]
    %v214 = vld [vmem:[%s5 + $0xc] sm:$0xf]
    %v215 = vld [vmem:[%s5 + $0x10] sm:$0xf]
    %v216 = vld [vmem:[%s5 + $0x14] sm:$0xf]
    %v217 = vld [vmem:[%s5 + $0x18] sm:$0xf]
    %v218 = vld [vmem:[%s5 + $0x1c] sm:$0xf]
    %v219 = vld [vmem:[%s6] sm:$0x1]
    %v221 = vlaneseq
    %v222 = vshrl.u32 %v221, 7
    %v223 = vsub.s32 0, %v222
    %v224 = vrot.slane %v219, %v223
    %v234 = vunpack.c.l.b16 %v211
    %v235 = vunpack.c.l.b16 %v212
    %v236 = vunpack.c.l.b16 %v213
    %v237 = vunpack.c.l.b16 %v214
    %v238 = vunpack.c.l.b16 %v215
    %v239 = vunpack.c.l.b16 %v216
    %v240 = vunpack.c.l.b16 %v217
    %v241 = vunpack.c.l.b16 %v218
    %v242 = vpack.c.b16 %v235, %v234
    %v243 = vpack.c.b16 %v237, %v236
    %v244 = vpack.c.b16 %v239, %v238
    %v245 = vpack.c.b16 %v241, %v240
    %vm250 = vcmask 523264
    %v252 = vsel %vm250, %v210, 0
    %254 = vmatprep.subr.bf16.mxu0 0
    %255 = vmatpush1.bf16.msra.mxu0 %v242
    %256 = vmatprep.subr.bf16.mxu0 0
    %257 = vmatpush1.bf16.msra.mxu0 %v243
    %258 = vmatprep.subr.bf16.mxu0 0
    %259 = vmatpush1.bf16.msra.mxu0 %v244
    %260 = vmatprep.subr.bf16.mxu0 0
    %261 = vmatpush1.bf16.msra.mxu0 %v245
    %262 = vmatprep.subr.bf16.mxu0 0
    %263 = vmatpush1.bf16.msra.mxu0 0
    %264 = vmatprep.subr.bf16.mxu0 0
    %265 = vmatpush1.bf16.msra.mxu0 0
    %266 = vmatprep.subr.bf16.mxu0 0
    %267 = vmatpush1.bf16.msra.mxu0 0
    %268 = vmatprep.subr.bf16.mxu0 0
    %269 = vmatpush1.bf16.msra.mxu0 0
    %270 = vmatprep.subr.bf16.mxu0 0
    %271 = vmatpush1.bf16.msra.mxu0 0
    %272 = vmatprep.subr.bf16.mxu0 0
    %273 = vmatpush1.bf16.msra.mxu0 0
    %274 = vmatprep.subr.bf16.mxu0 0
    %275 = vmatpush1.bf16.msra.mxu0 0
    %276 = vmatprep.subr.bf16.mxu0 0
    %277 = vmatpush1.bf16.msra.mxu0 0
    %278 = vmatprep.subr.bf16.mxu0 0
    %279 = vmatpush1.bf16.msra.mxu0 0
    %280 = vmatprep.subr.bf16.mxu0 0
    %281 = vmatpush1.bf16.msra.mxu0 0
    %282 = vmatprep.subr.bf16.mxu0 0
    %283 = vmatpush1.bf16.msra.mxu0 0
    %284 = vmatprep.subr.bf16.mxu0 0
    %285 = vmatpush1.bf16.msra.mxu0 0
    %286 = vmatprep.mubr.bf16.mxu0 0
    %287 = vmatmul.mubr.bf16.gmra.mrb[0].mxu0 %v252
    %v288 = vpop.f32.mrb[0].mxu0
    %v289 = vadd.f32 %v224, %v288
    %v290 = vpop.f32.mrb[0].mxu0
    %v291 = vpop.f32.mrb[0].mxu0
    %v292 = vpop.f32.mrb[0].mxu0
    %293 = vdwg.mxu0
    %294 = vst [vmem:[#allocation2] sm:$0xff] %v289
    // Predicated region
    $region30: #{mean_teacher_forward.1} parent=1 // pred_check
      _
    $region31: #{mean_teacher_forward.1} parent=1 // pred_check_branch
      %296 = sbr.rel (0) target = $region33
    $region32: #{mean_teacher_forward.1} parent=1 // pred_region
      %s298 = ssub.s32 128, 128
      %299 = vsyncadd [#allocation3], %s298
      %s301 = sshll.u32 [#allocation2], 4
      %s302 = int_to_ptr.vmem [resolvable:$true] %s301
      %304 = dma.vmem_to_hbm [thread:$0]  %s302, 128, %s7, [#allocation3]
    $region33: #{mean_teacher_forward.1} parent=1 // pred_fallthru
      _
    // Predicated region
    $region34: #{mean_teacher_forward.1} parent=1 // pred_check
      _
    $region35: #{mean_teacher_forward.1} parent=1 // pred_check_branch
      %306 = sbr.rel (0) target = $region37
    $region36: #{mean_teacher_forward.1} parent=1 // pred_region
      %307 = dma.done [#allocation3], 128
    $region37: #{mean_teacher_forward.1} parent=1 // pred_fallthru
      _
    %308 = vsyncpa [#allocation3], 1

</llo_original>
